<compile_context>
chip_gen: v7x
topology: tpu7x:2x2x1
jax: 0.10.0
libtpu: 0.0.40
codegen_flags: <defaults>
</compile_context>

<pallas_src>
import functools

import numpy as np
import jax
import jax.numpy as jnp
from jax import lax
from jax.experimental import pallas as pl
from jax.experimental.pallas import tpu as pltpu


# ------------------------------------------------------------------ params ---
def make_positional_encoding_table(max_len, d_model, dtype=jnp.float32):
    """Deterministic sinusoidal PE table, identical to the torch __init__."""
    position = jnp.arange(max_len, dtype=jnp.float32)[:, None]          # (L, 1)
    div_term = jnp.exp(
        jnp.arange(0, d_model, 2, dtype=jnp.float32)
        * (-np.log(10000.0) / d_model)
    )                                                                   # (D/2,)
    pe = jnp.zeros((max_len, d_model), dtype=jnp.float32)
    pe = pe.at[:, 0::2].set(jnp.sin(position * div_term))
    pe = pe.at[:, 1::2].set(jnp.cos(position * div_term))
    return pe.astype(dtype)                                             # (L, D)


# ----------------------------------------------------------------- dropout ---
def _dropout_apply(y, seed_u32, row0, col0, keep_prob):
    """Bernoulli(keep_prob) mask, scaled by 1/keep_prob.

    Mask is a pure hash of (seed, global_row, global_col) -> identical result
    for any tiling / grid layout.  Pure VPU integer ops (no TPU-only PRNG).
    """
    # TODO(synk): cannot reproduce torch's RNG stream bit-for-bit; only the
    # distributional semantics of nn.Dropout are matched.
    shape = y.shape
    rows = (row0 + lax.broadcasted_iota(jnp.int32, shape, 0)).astype(jnp.uint32)
    cols = (col0 + lax.broadcasted_iota(jnp.int32, shape, 1)).astype(jnp.uint32)
    key = ((rows * jnp.uint32(0x9E3779B1))
           ^ (cols * jnp.uint32(0x85EBCA77))
           ^ (seed_u32 * jnp.uint32(0xC2B2AE35)))
    # lowbias32 finalizer
    key = key ^ (key >> jnp.uint32(16))
    key = key * jnp.uint32(0x7FEB352D)
    key = key ^ (key >> jnp.uint32(15))
    key = key * jnp.uint32(0x846CA68B)
    key = key ^ (key >> jnp.uint32(16))
    thresh = jnp.uint32(min(int(round(keep_prob * 4294967296.0)), 4294967295))
    keep = key < thresh
    # Scale in f32 (avoids bf16-rounded 1/keep bias), single cast back.
    y_scaled = y.astype(jnp.float32) * jnp.float32(1.0 / keep_prob)
    return jnp.where(keep, y_scaled, jnp.float32(0.0)).astype(y.dtype)


# ----------------------------------------------------------------- kernels ---
# Aligned path (D % 128 == 0): x block (ts, tn) with tn a multiple of D,
# pe block (ts, D); add per batch slice -> no broadcast temp, full-width stores.
def _add_kernel_sliced(x_ref, pe_ref, o_ref, *, d_model, reps):
    pe = pe_ref[...]                                  # (ts, D)
    for r in range(reps):
        c0, c1 = r * d_model, (r + 1) * d_model       # static slices
        o_ref[:, c0:c1] = x_ref[:, c0:c1] + pe


def _add_dropout_kernel_sliced(seed_ref, x_ref, pe_ref, o_ref, *,
                               d_model, reps, keep_prob, tile_s, tile_n):
    seed = seed_ref[0].astype(jnp.uint32)
    row0 = pl.program_id(0) * tile_s
    col_base = pl.program_id(1) * tile_n
    pe = pe_ref[...]
    for r in range(reps):                             # bits temp is 1/reps of block
        c0, c1 = r * d_model, (r + 1) * d_model
        y = x_ref[:, c0:c1] + pe
        o_ref[:, c0:c1] = _dropout_apply(y, seed, row0, col_base + c0, keep_prob)


# Broadcast path (D % 128 != 0): pe pre-broadcast host-side to (S, B*D),
# kernel is a plain full-width add.
def _add_kernel_full(x_ref, pe_ref, o_ref):
    o_ref[...] = x_ref[...] + pe_ref[...]


def _add_dropout_kernel_full(seed_ref, x_ref, pe_ref, o_ref, *,
                             keep_prob, tile_s, tile_n):
    seed = seed_ref[0].astype(jnp.uint32)
    row0 = pl.program_id(0) * tile_s
    col0 = pl.program_id(1) * tile_n
    y = x_ref[...] + pe_ref[...]
    o_ref[...] = _dropout_apply(y, seed, row0, col0, keep_prob)


# -------------------------------------------------------------- tile choice ---
def _sublane_align(dtype):
    # native sublane packing: 8 rows for 32-bit, 16 for 16-bit, 32 for 8-bit
    return max(8, 32 // jnp.dtype(dtype).itemsize)


def _choose_tiles(S, N, itemsize, *, sub_align, lane_quantum, training,
                  target_bytes, user_tile_s=None, user_tile_n=None):
    """Pick (tile_s, tile_n) so one x block is ~target_bytes (budget includes
    the 4 B/elem uint32 random-bits temporary in training mode)."""
    bpe = itemsize + (4 if training else 0)

    # ---- lane (last) axis ---------------------------------------------------
    if user_tile_n is not None:
        tn = int(user_tile_n)
    elif (lane_quantum is not None and N > lane_quantum
          and min(S, sub_align) * N * bpe > target_bytes):
        # even a minimal-height full-width slab busts the budget -> tile lanes
        tn = (target_bytes // max(1, sub_align * bpe)) // lane_quantum * lane_quantum
        tn = int(min(max(tn, lane_quantum), (N // lane_quantum) * lane_quantum))
    else:
        tn = N
        # TODO(synk): if N is not 128-tileable and a sub_align-row slab still
        # exceeds the budget, raise vmem_limit_bytes at the call site.

    # ---- row (sublane) axis --------------------------------------------------
    if user_tile_s is not None:
        ts = min(int(user_tile_s), S)
        if ts < S:
            ts = max(sub_align, (ts // sub_align) * sub_align)
    elif S <= sub_align:
        ts = S
    else:
        ts = target_bytes // max(1, tn * bpe)
        ts = max(sub_align, (ts // sub_align) * sub_align)
        if ts >= S:
            ts = S
        # v7x has 2 TensorCores: make sure the parallel grid has >= 2 steps so
        # both cores stream; near-free on single-TC chips.
        if ts >= S and N <= tn and S >= 2 * sub_align:
            half = -(-S // 2)
            ts = ((half + sub_align - 1) // sub_align) * sub_align
            if ts >= S:
                ts = S
    return ts, tn


# ----------------------------------------------------------------- wrapper ---
def positional_encoding(x, pe_table, *, dropout_p=0.1, training=False, seed=0,
                        tile_s=None, tile_n=None,
                        target_block_bytes=2 * 1024 * 1024,
                        vmem_limit_bytes=None):
    """
    x:        (S, B, D) activations
    pe_table: (max_len, D) sinusoidal table (only the first S rows are used)
    Returns dropout(x + pe[:S]) with the same shape/dtype as x.

    target_block_bytes: ~2 MiB is safe everywhere (v5e 16 MiB scoped default);
    on v6e/v7x ~4 MiB is fine if vmem_limit_bytes is left at default.
    """
    S, B, D = x.shape
    max_len, d_model = pe_table.shape
    if max_len < S or d_model != D:
        raise ValueError("pe_table must be (max_len >= S, d_model == D)")
    if not (0.0 <= dropout_p < 1.0):
        raise ValueError("dropout_p must be in [0, 1)")

    itemsize = jnp.dtype(x.dtype).itemsize
    N = B * D
    x2 = x.reshape(S, N)                         # free row-major view
    pe = pe_table[:S].astype(x.dtype)            # (S, D) in x dtype

    aligned = (D % 128 == 0)
    if aligned:
        lane_quantum = D                         # tn multiple of D (and of 128)
        pe_arr = pe                              # (S, D): minimal pe HBM traffic
    else:
        lane_quantum = 128 if (N % 128 == 0 and N > 128) else None
        pe_arr = jnp.tile(pe, (1, B))            # (S, N): lane-dense fallback

    sub_align = _sublane_align(x.dtype)
    ts, tn = _choose_tiles(
        S, N, itemsize, sub_align=sub_align, lane_quantum=lane_quantum,
        training=(training and dropout_p > 0.0), target_bytes=target_block_bytes,
        user_tile_s=tile_s, user_tile_n=tile_n)

    grid = (pl.cdiv(S, ts), pl.cdiv(N, tn))
    x_blk = (ts, tn)
    keep_prob = 1.0 - float(dropout_p)

    if aligned:
        reps = tn // D
        pe_blk = (ts, D)
        x_idx_ev = lambda i, j: (i, j)
        pe_idx_ev = lambda i, j: (i, 0)
        x_idx_tr = lambda i, j, s: (i, j)
        pe_idx_tr = lambda i, j, s: (i, 0)
        k_eval = functools.partial(_add_kernel_sliced, d_model=D, reps=reps)
        k_train = functools.partial(_add_dropout_kernel_sliced, d_model=D,
                                    reps=reps, keep_prob=keep_prob,
                                    tile_s=ts, tile_n=tn)
    else:
        pe_blk = (ts, tn)
        x_idx_ev = lambda i, j: (i, j)
        pe_idx_ev = lambda i, j: (i, j)
        x_idx_tr = lambda i, j, s: (i, j)
        pe_idx_tr = lambda i, j, s: (i, j)
        k_eval = _add_kernel_full
        k_train = functools.partial(_add_dropout_kernel_full,
                                    keep_prob=keep_prob, tile_s=ts, tile_n=tn)

    out_struct = jax.ShapeDtypeStruct((S, N), x.dtype)
    compiler_params = pltpu.CompilerParams(
        dimension_semantics=("parallel", "parallel"),   # megacore sharding
        vmem_limit_bytes=vmem_limit_bytes,
    )
    cost = pl.CostEstimate(
        flops=S * N,
        transcendentals=0,
        bytes_accessed=2 * S * N * itemsize + int(pe_arr.size) * itemsize,
    )
    # TODO(synk): optionally alias x -> output via input_output_aliases to drop
    # the output HBM allocation (requires donating x at the caller's jit).

    if not training or dropout_p == 0.0:
        out = pl.pallas_call(
            k_eval,
            out_shape=out_struct,
            grid_spec=pltpu.PrefetchScalarGridSpec(
                num_scalar_prefetch=0,
                grid=grid,
                in_specs=[pl.BlockSpec(x_blk, x_idx_ev),
                          pl.BlockSpec(pe_blk, pe_idx_ev)],
                out_specs=pl.BlockSpec(x_blk, x_idx_ev),
            ),
            compiler_params=compiler_params,
            cost_estimate=cost,
        )(x2, pe_arr)
    else:
        seed_arr = jnp.asarray([seed], dtype=jnp.int32)
        out = pl.pallas_call(
            k_train,
            out_shape=out_struct,
            grid_spec=pltpu.PrefetchScalarGridSpec(
                num_scalar_prefetch=1,
                grid=grid,
                in_specs=[pl.BlockSpec(x_blk, x_idx_tr),
                          pl.BlockSpec(pe_blk, pe_idx_tr)],
                out_specs=pl.BlockSpec(x_blk, x_idx_tr),
            ),
            compiler_params=compiler_params,
            cost_estimate=cost,
        )(seed_arr, x2, pe_arr)

    return out.reshape(S, B, D)


# -------------------------------------------------------------------- main ---
if __name__ == "__main__":
    key = jax.random.PRNGKey(0)
    k1, k2 = jax.random.split(key)
    dropout_p = 0.1

    # Case 1: module-like small shape (D=32 -> lane-dense broadcast path), eval.
    S, B, D = 8, 2, 32
    x = jax.random.normal(k1, (S, B, D), dtype=jnp.float32)
    pe_table = make_positional_encoding_table(64, D)
    out = jax.block_until_ready(
        positional_encoding(x, pe_table, dropout_p=dropout_p, training=False))
    ref = x + pe_table[:S][:, None, :]
    assert out.shape == x.shape and out.dtype == x.dtype
    np.testing.assert_allclose(np.asarray(out), np.asarray(ref),
                               rtol=1e-6, atol=1e-6)

    # Case 2: D multiple of 128 (sliced per-batch add) with non-dividing S
    # (exercises cdiv tail masking), eval mode.
    S2, B2, D2 = 20, 2, 128
    x_b = jax.random.normal(k2, (S2, B2, D2), dtype=jnp.float32)
    pe_table_b = make_positional_encoding_table(32, D2)
    out_b = jax.block_until_ready(
        positional_encoding(x_b, pe_table_b, dropout_p=dropout_p,
                            training=False, tile_s=8))
    ref_b = x_b + pe_table_b[:S2][:, None, :]
    np.testing.assert_allclose(np.asarray(out_b), np.asarray(ref_b),
                               rtol=1e-6, atol=1e-6)

    # Case 3: training-mode dropout (broadcast path): kept values equal the
    # scaled reference, drop fraction is sane.
    out_d = jax.block_until_ready(
        positional_encoding(x, pe_table, dropout_p=dropout_p, training=True,
                            seed=0))
    assert out_d.shape == x.shape and out_d.dtype == x.dtype
    out_d_np, ref_np = np.asarray(out_d), np.asarray(ref)
    kept = out_d_np != 0.0
    dropped_frac = 1.0 - kept.mean()
    assert 0.0 <= dropped_frac <= 0.4, dropped_frac        # ~10% dropped
    np.testing.assert_allclose(
        out_d_np[kept], (ref_np * np.float32(1.0 / (1.0 - dropout_p)))[kept],
        rtol=1e-5, atol=1e-5)

    # Case 4: training-mode dropout on the sliced path; mask must be identical
    # across different tilings (hash keyed on global coordinates).
    out_t1 = jax.block_until_ready(
        positional_encoding(x_b, pe_table_b, dropout_p=dropout_p, training=True,
                            seed=3, tile_s=8))
    out_t2 = jax.block_until_ready(
        positional_encoding(x_b, pe_table_b, dropout_p=dropout_p, training=True,
                            seed=3))                        # default tiling
    assert out_t1.shape == x_b.shape
    np.testing.assert_array_equal(np.asarray(out_t1), np.asarray(out_t2))
    assert bool(jnp.all(jnp.isfinite(out_t1)))

    print("KERNEL_OK")
</pallas_src>

<mosaic_0001>
module attributes {stable_mosaic.version = 11 : i64} {
  func.func @_add_kernel_full(%arg0: i32, %arg1: i32, %arg2: memref<8x64xf32, #tpu.memory_space<vmem>>, %arg3: memref<8x64xf32, #tpu.memory_space<vmem>>, %arg4: memref<8x64xf32, #tpu.memory_space<vmem>>) attributes {dimension_semantics = [#tpu.dimension_semantics<parallel>, #tpu.dimension_semantics<parallel>], iteration_bounds = array<i64: 1, 1>, scalar_prefetch = 0 : i64, scratch_operands = 0 : i64, tpu.core_type = #tpu.core_type<tc>, window_params = [{transform_indices = @transform_0, window_bounds = array<i64: 8, 64>}, {transform_indices = @transform_1, window_bounds = array<i64: 8, 64>}, {transform_indices = @transform_2, window_bounds = array<i64: 8, 64>}]} {
    %c0 = arith.constant 0 : index
    %c0_0 = arith.constant 0 : index
    %0 = vector.load %arg2[%c0, %c0_0] : memref<8x64xf32, #tpu.memory_space<vmem>>, vector<8x64xf32>
    %c0_1 = arith.constant 0 : index
    %c0_2 = arith.constant 0 : index
    %1 = vector.load %arg3[%c0_1, %c0_2] : memref<8x64xf32, #tpu.memory_space<vmem>>, vector<8x64xf32>
    %2 = arith.addf %0, %1 : vector<8x64xf32>
    %c0_3 = arith.constant 0 : index
    %c0_4 = arith.constant 0 : index
    %3 = vector.load %arg4[%c0_3, %c0_4] : memref<8x64xf32, #tpu.memory_space<vmem>>, vector<8x64xf32>
    tpu.vector_store %arg4[%c0_3, %c0_4], %2 {strides = array<i32>} : memref<8x64xf32, #tpu.memory_space<vmem>>, vector<8x64xf32>,
    return
  }
  func.func @transform_0(%arg0: i32, %arg1: i32) -> (i32, i32) {
    %c0_i32 = arith.constant 0 : i32
    return %arg0, %arg1 : i32, i32
  }
  func.func @transform_1(%arg0: i32, %arg1: i32) -> (i32, i32) {
    %c0_i32 = arith.constant 0 : i32
    return %arg0, %arg1 : i32, i32
  }
  func.func @transform_2(%arg0: i32, %arg1: i32) -> (i32, i32) {
    %c0_i32 = arith.constant 0 : i32
    return %arg0, %arg1 : i32, i32
  }
}

</mosaic_0001>

<llo_original>
// kernel: tpu_custom_call.1
$region0: #{tpu_custom_call.1}
  #allocation0 [shape = 'u32[]', space=smem, size = 0x4, offset = 0x4, fixed_abs, tag = 'smem constant byte address 0x4 - core index']
  #allocation1 [shape = 'u32[144,128]{1,0:T(1,128)}', space=vmem, size = 0x12000, scoped, tag = 'internal scratch']
  %s0 = inlined_call_operand.hbm [shape: f32[8,64], index: 0, kind: input, shape index: {}]
  %s1 = inlined_call_operand.hbm [shape: f32[8,64], index: 1, kind: input, shape index: {}]
  %s2 = inlined_call_operand.hbm [shape: f32[8,64], index: 2, kind: output, shape index: {}]
  %s3 = sld [smem:[#allocation0]]
  $region26: #{tpu_custom_call.1} parent=0
    _
  %s5 = ssub.s32 1, %s3
  %s6 = scalar_select 0, %s5, %s3
  $region1: #{tpu_custom_call.1} parent=0
    #allocation2 [shape = 'u8[4096]{0}', space=vmem, size = 0x1000, scoped, tag = 'input window, operand 0, single buffered']
    #allocation3 [shape = 's32[1]{0}', space=sflag, size = 0x4, scoped, tag = 'scoped memory for tpu_custom_call.1']
    #allocation4 [shape = 's32[1]{0}', space=sflag, size = 0x4, scoped, tag = 'scoped memory for tpu_custom_call.1']
    #allocation5 [shape = 'u8[4096]{0}', space=vmem, size = 0x1000, scoped, tag = 'input window, operand 1, single buffered']
    #allocation6 [shape = 's32[1]{0}', space=sflag, size = 0x4, scoped, tag = 'scoped memory for tpu_custom_call.1']
    #allocation7 [shape = 'u8[4096]{0}', space=vmem, size = 0x1000, scoped, tag = 'output window, operand 0, single buffered']
    %7 = vsyncpa [#allocation3], 0
    %8 = vsyncpa [#allocation6], 0
    %9 = vsyncpa [#allocation4], 0
    // Predicated region
    $region2: #{tpu_custom_call.1} parent=1 // pred_check
      _
    $region3: #{tpu_custom_call.1} parent=1 // pred_check_branch
      %11 = sbr.rel (0) target = $region5
    $region4: #{tpu_custom_call.1} parent=1 // pred_region
      %s13 = ssub.s32 128, 128
      %14 = vsyncadd [#allocation3], %s13
      %s16 = sshll.u32 [#allocation2], 4
      %s17 = int_to_ptr.vmem [resolvable:$true] %s16
      %19 = dma.hbm_to_vmem [thread:$0]  %s0, 128, %s17, [#allocation3]
    $region5: #{tpu_custom_call.1} parent=1 // pred_fallthru
      _
    // Predicated region
    $region6: #{tpu_custom_call.1} parent=1 // pred_check
      _
    $region7: #{tpu_custom_call.1} parent=1 // pred_check_branch
      %21 = sbr.rel (0) target = $region9
    $region8: #{tpu_custom_call.1} parent=1 // pred_region
      %s23 = ssub.s32 128, 128
      %24 = vsyncadd [#allocation6], %s23
      %s26 = sshll.u32 [#allocation5], 4
      %s27 = int_to_ptr.vmem [resolvable:$true] %s26
      %29 = dma.hbm_to_vmem [thread:$0]  %s1, 128, %s27, [#allocation6]
    $region9: #{tpu_custom_call.1} parent=1 // pred_fallthru
      _
    // Predicated region
    $region10: #{tpu_custom_call.1} parent=1 // pred_check
      _
    $region11: #{tpu_custom_call.1} parent=1 // pred_check_branch
      %31 = sbr.rel (0) target = $region13
    $region12: #{tpu_custom_call.1} parent=1 // pred_region
      %32 = dma.done [#allocation3], 128
    $region13: #{tpu_custom_call.1} parent=1 // pred_fallthru
      _
    // Predicated region
    $region14: #{tpu_custom_call.1} parent=1 // pred_check
      _
    $region15: #{tpu_custom_call.1} parent=1 // pred_check_branch
      %34 = sbr.rel (0) target = $region17
    $region16: #{tpu_custom_call.1} parent=1 // pred_region
      %35 = dma.done [#allocation6], 128
    $region17: #{tpu_custom_call.1} parent=1 // pred_fallthru
      _
    %v36 = vld [vmem:[#allocation2] sm:$0xff]
    %v37 = vld [vmem:[#allocation5] sm:$0xff]
    %v38 = vadd.f32 %v36, %v37
    %vm39 = vcmask 523264
    %40 = vst.msk [vmem:[#allocation7] sm:$0xff] %vm39, %v38
    // Predicated region
    $region18: #{tpu_custom_call.1} parent=1 // pred_check
      _
    $region19: #{tpu_custom_call.1} parent=1 // pred_check_branch
      %42 = sbr.rel (0) target = $region21
    $region20: #{tpu_custom_call.1} parent=1 // pred_region
      %s44 = ssub.s32 128, 128
      %45 = vsyncadd [#allocation4], %s44
      %s47 = sshll.u32 [#allocation7], 4
      %s48 = int_to_ptr.vmem [resolvable:$true] %s47
      %50 = dma.vmem_to_hbm [thread:$0]  %s48, 128, %s2, [#allocation4]
    $region21: #{tpu_custom_call.1} parent=1 // pred_fallthru
      _
    // Predicated region
    $region22: #{tpu_custom_call.1} parent=1 // pred_check
      _
    $region23: #{tpu_custom_call.1} parent=1 // pred_check_branch
      %52 = sbr.rel (0) target = $region25
    $region24: #{tpu_custom_call.1} parent=1 // pred_region
      %53 = dma.done [#allocation4], 128
    $region25: #{tpu_custom_call.1} parent=1 // pred_fallthru
      _
    %54 = vsyncpa [#allocation3], 1
    %55 = vsyncpa [#allocation6], 1
    %56 = vsyncpa [#allocation4], 1

</llo_original>
